<compile_context>
chip_gen: v7x
topology: tpu7x:2x2x1
jax: 0.10.0
libtpu: 0.0.40
codegen_flags: <defaults>
</compile_context>

<pallas_src>
import functools

import jax
import jax.numpy as jnp
from jax.experimental import pallas as pl
from jax.experimental.pallas import tpu as pltpu


_LANES = 128          # vreg lane width
_SUBLANES = 8         # vreg sublane count (chunk-row alignment)
_TINY_BYTES = 64 * 1024
_NUM_DMA_CHUNKS = 8   # back-to-back DMAs to keep multiple DMA engines busy


# -----------------------------------------------------------------------------
# 1. Default forward: identity.  Pure JAX — no pallas_call, no launch overhead.
# -----------------------------------------------------------------------------
def parameters_matrix_forward(weights: jax.Array) -> jax.Array:
    """Pallas-free equivalent of ParametersMatrix.forward(): returns `weights`.

    forward() is the identity of the parameter matrix; emitting any kernel for
    it only adds launch/lowering overhead (and a hidden defensive copy unless
    the buffer is donated), so the fastest correct implementation is to return
    the array unchanged.
    """
    return weights


# -----------------------------------------------------------------------------
# 2. Materializing copy: chunked direct HBM->HBM DMA (fresh output buffer).
# -----------------------------------------------------------------------------
def _chunked_hbm_copy_kernel(chunks, w_hbm_ref, o_hbm_ref, sem_ref):
    """Issue one DMA per (static) row chunk, then wait on all of them.

    `chunks` is a static tuple of (row_start, row_count) over the lane-dense
    (rows, 128) slab.  Source and destination both live in HBM
    (memory_space=pl.ANY); data never touches VMEM or vregs.
    """
    # Start all DMAs back-to-back so several are in flight at once.
    for k, (start, size) in enumerate(chunks):
        pltpu.make_async_copy(
            w_hbm_ref.at[pl.ds(start, size), :],
            o_hbm_ref.at[pl.ds(start, size), :],
            sem_ref.at[k],
        ).start()
    # Then wait on each.
    for k, (start, size) in enumerate(chunks):
        pltpu.make_async_copy(
            w_hbm_ref.at[pl.ds(start, size), :],
            o_hbm_ref.at[pl.ds(start, size), :],
            sem_ref.at[k],
        ).wait()


def parameters_matrix_forward_copy(
    weights: jax.Array, *, force_pallas: bool = False
) -> jax.Array:
    """Materializing forward: returns a fresh copy of `weights`.

    The matrix is presented as a lane-dense (rows, 128) slab (padded in the
    wrapper if size0*size1 is not a multiple of 128), then copied HBM->HBM via
    a few chunked DMAs inside one Pallas call.
    """
    size0, size1 = weights.shape
    dtype = weights.dtype
    itemsize = jnp.dtype(dtype).itemsize
    total = size0 * size1

    # Kernel-launch + DMA-setup overhead dominates for tiny matrices; let XLA
    # do the copy directly.
    if total * itemsize < _TINY_BYTES and not force_pallas:
        return jnp.copy(weights)

    # Lane-dense presentation: flatten (free, row-major) and pad up to a
    # multiple of 128 so every DMA row is a dense full-lane row.
    flat = weights.reshape(-1)
    pad = (-total) % _LANES
    if pad:
        flat = jnp.pad(flat, (0, pad))
    slab = flat.reshape(-1, _LANES)
    rows = slab.shape[0]

    # Static, sublane-aligned row chunks (<= _NUM_DMA_CHUNKS of them).
    chunk_rows = max(1, pl.cdiv(rows, _NUM_DMA_CHUNKS))
    chunk_rows = max(_SUBLANES, ((chunk_rows + _SUBLANES - 1) // _SUBLANES) * _SUBLANES)
    chunks = []
    start = 0
    while start < rows:
        size = min(chunk_rows, rows - start)
        chunks.append((start, size))
        start += size
    chunks = tuple(chunks)

    out_slab = pl.pallas_call(
        functools.partial(_chunked_hbm_copy_kernel, chunks),
        out_shape=jax.ShapeDtypeStruct(slab.shape, dtype),
        in_specs=[pl.BlockSpec(memory_space=pl.ANY)],
        out_specs=pl.BlockSpec(memory_space=pl.ANY),
        scratch_shapes=[pltpu.SemaphoreType.DMA((len(chunks),))],
        cost_estimate=pl.CostEstimate(
            flops=0,
            transcendentals=0,
            bytes_accessed=2 * slab.size * itemsize,
        ),
    )(slab)

    out = out_slab.reshape(-1)
    if pad:
        out = out[:total]
    return out.reshape(size0, size1)


def init_parameters_matrix(size0: int, size1: int, dtype=jnp.float32) -> jax.Array:
    """Deterministic init matching nn.init.zeros_(self.weights)."""
    return jnp.zeros((size0, size1), dtype=dtype)


if __name__ == "__main__":
    # Small shapes consistent with the module (a learnable size0 x size1 matrix).
    size0, size1 = 8, 32

    # The module has no inputs; weights are deterministically zero per
    # nn.init.zeros_.  PRNGKey(0) is used below for a second, non-trivial check.
    key = jax.random.PRNGKey(0)
    weights = init_parameters_matrix(size0, size1)

    # Default forward: pure identity, no kernel launch.
    out = parameters_matrix_forward(weights)
    out = jax.block_until_ready(out)
    assert out.shape == (size0, size1)
    assert out.dtype == weights.dtype
    assert bool(jnp.all(out == 0.0))

    # Materializing copy via the chunked HBM->HBM DMA kernel (force the Pallas
    # path at this tiny shape so the kernel is actually exercised).
    out_copy = parameters_matrix_forward_copy(weights, force_pallas=True)
    out_copy = jax.block_until_ready(out_copy)
    assert out_copy.shape == (size0, size1)
    assert out_copy.dtype == weights.dtype
    assert bool(jnp.all(out_copy == weights))

    # Non-multiple-of-128 total exercises the wrapper-side padding path, with
    # non-zero data so the copy is meaningfully checked.
    w2 = jax.random.normal(key, (24, 40), dtype=jnp.float32)
    out2 = jax.block_until_ready(
        parameters_matrix_forward_copy(w2, force_pallas=True)
    )
    assert out2.shape == w2.shape
    assert bool(jnp.all(out2 == w2))

    print("KERNEL_OK")
</pallas_src>

<mosaic_0001>
module attributes {stable_mosaic.version = 11 : i64} {
  func.func @_chunked_hbm_copy_kernel(%arg0: memref<2x128xf32, #tpu.memory_space<any>>, %arg1: memref<2x128xf32, #tpu.memory_space<any>>, %arg2: memref<1x!tpu.dma_semaphore, #tpu.memory_space<semaphore_mem>>) attributes {dimension_semantics = [], scalar_prefetch = 0 : i64, scratch_operands = 1 : i64, tpu.core_type = #tpu.core_type<tc>} {
    %c0_i32 = arith.constant 0 : i32
    %c0_i32_0 = arith.constant 0 : i32
    %c0_i32_1 = arith.constant 0 : i32
    %0 = tpu.memref_slice %arg0[%c0_i32_0, %c0_i32_1] : memref<2x128xf32, #tpu.memory_space<any>> -> memref<2x128xf32, #tpu.memory_space<any>>
    %c0_i32_2 = arith.constant 0 : i32
    %c0_i32_3 = arith.constant 0 : i32
    %1 = tpu.memref_slice %arg1[%c0_i32_2, %c0_i32_3] : memref<2x128xf32, #tpu.memory_space<any>> -> memref<2x128xf32, #tpu.memory_space<any>>
    %2 = tpu.memref_slice %arg2[%c0_i32] : memref<1x!tpu.dma_semaphore, #tpu.memory_space<semaphore_mem>> -> memref<1x!tpu.dma_semaphore, #tpu.memory_space<semaphore_mem>>
    %3 = tpu.memref_squeeze %2 : memref<1x!tpu.dma_semaphore, #tpu.memory_space<semaphore_mem>> -> memref<!tpu.dma_semaphore, #tpu.memory_space<semaphore_mem>>
    tpu.enqueue_dma source(%0 : memref<2x128xf32, #tpu.memory_space<any>>) target(%1 : memref<2x128xf32, #tpu.memory_space<any>>) target_semaphore(%3 : memref<!tpu.dma_semaphore, #tpu.memory_space<semaphore_mem>>)
    %c0_i32_4 = arith.constant 0 : i32
    %c0_i32_5 = arith.constant 0 : i32
    %c0_i32_6 = arith.constant 0 : i32
    %4 = tpu.memref_slice %arg0[%c0_i32_5, %c0_i32_6] : memref<2x128xf32, #tpu.memory_space<any>> -> memref<2x128xf32, #tpu.memory_space<any>>
    %c0_i32_7 = arith.constant 0 : i32
    %c0_i32_8 = arith.constant 0 : i32
    %5 = tpu.memref_slice %arg1[%c0_i32_7, %c0_i32_8] : memref<2x128xf32, #tpu.memory_space<any>> -> memref<2x128xf32, #tpu.memory_space<any>>
    %6 = tpu.memref_slice %arg2[%c0_i32_4] : memref<1x!tpu.dma_semaphore, #tpu.memory_space<semaphore_mem>> -> memref<1x!tpu.dma_semaphore, #tpu.memory_space<semaphore_mem>>
    %7 = tpu.memref_squeeze %6 : memref<1x!tpu.dma_semaphore, #tpu.memory_space<semaphore_mem>> -> memref<!tpu.dma_semaphore, #tpu.memory_space<semaphore_mem>>
    tpu.wait_dma2 semaphore(%7 : memref<!tpu.dma_semaphore, #tpu.memory_space<semaphore_mem>>) src(%4 : memref<2x128xf32, #tpu.memory_space<any>>) dst(%5 : memref<2x128xf32, #tpu.memory_space<any>>)
    return
  }
}

</mosaic_0001>

<llo_original>
// kernel: tpu_custom_call.1
$region0: #{tpu_custom_call.1}
  #allocation0 [shape = 'u32[]', space=smem, size = 0x4, offset = 0x4, fixed_abs, tag = 'smem constant byte address 0x4 - core index']
  #allocation1 [shape = 'u32[144,128]{1,0:T(1,128)}', space=vmem, size = 0x12000, scoped, tag = 'internal scratch']
  #allocation2 [shape = 's32[1]{0}', space=sflag, size = 0x4, scoped, tag = 'scratch operand']
  #allocation3 [shape = 's32[]', space=sflag, size = 0x4, offset = 0, fixed_abs, tag = 'sflag constant byte address 0x0 - dummy sync flag']
  #allocation4 [shape = 'u32[0]{0}', space=smem, size = 0, offset = 0, fixed_abs, tag = 'smem constant byte address 0x0 - null']
  %s0 = inlined_call_operand.hbm [shape: f32[2,128], index: 0, kind: input, shape index: {}]
  %s1 = inlined_call_operand.hbm [shape: f32[2,128], index: 1, kind: output, shape index: {}]
  %s2 = sld [smem:[#allocation0]]
  $region2: #{tpu_custom_call.1} parent=0
    _
  %s4 = ssub.s32 1, %s2
  %s5 = scalar_select 0, %s4, %s2
  %s7 = sshll.u32 1, 14
  %s8 = sxor.u32 4294967295, %s7
  %s11 = sshll.u32 3, 24
  %s12 = sxor.u32 4294967295, %s11
  %s13 = sand.u32 0, %s12
  %s15 = sor.u32 %s13, 0
  %18 = dma.general %s0, 32, %s1, [#allocation2], [#allocation3], [#allocation4], %s15, 0
  %s19 = smul.u32 2, 1
  %s20 = sshll.u32 %s19, 4
  %21 = dma.done [#allocation2], %s20
  %22 = vsyncmov [#allocation2]
  %s23 = vpop.sfrf %22
  %p24 = scmp.eq.s32.totalorder %s23, 0
  %p25 = pneg %p24
  %27 = shalt.err (%p25)

</llo_original>
